<compile_context>
chip_gen: v5e
topology: v5e:2x2
jax: 0.10.0
libtpu: 0.0.40
codegen_flags: <defaults>
</compile_context>

<pallas_src>
import jax
import jax.numpy as jnp
from jax.experimental import pallas as pl
from jax.experimental.pallas import tpu as pltpu

TAF = 2.0
ALPHA = 1.0
EPS = 1e-7
WH_MIN, WH_MAX = 1e-7, 1e7

LANE = 128      # boxes per lane row
TM_MAX = 256    # sublane rows per grid step -> 32768 boxes, ~640 KiB / input block


def _xy_sigma(ref):
    """ref: (5, TM, 128) feature-major block -> center + sigma entries, each (TM, 128)."""
    cx = ref[0]
    cy = ref[1]
    w = jnp.clip(ref[2], WH_MIN, WH_MAX)
    h = jnp.clip(ref[3], WH_MIN, WH_MAX)
    r = ref[4]
    w2 = 0.25 * w * w                 # (w/2)^2
    h2 = 0.25 * h * h                 # (h/2)^2
    s = 0.5 * (w2 + h2)
    c = 0.5 * (w2 - h2)
    cos2r = jnp.cos(2.0 * r)
    sin2r = jnp.sin(2.0 * r)
    a = s + c * cos2r                 # sigma[0,0]
    b = c * sin2r                     # sigma[0,1] == sigma[1,0]
    d = s - c * cos2r                 # sigma[1,1]
    return cx, cy, a, b, d


def _kld_kernel(pred_ref, tgt_ref, loss_ref, kld_ref):
    # pred_ref/tgt_ref: (5, TM, 128); loss_ref/kld_ref: (TM, 128)
    px, py, ap, bp, dp = _xy_sigma(pred_ref)
    tx, ty, at, bt, dt_ = _xy_sigma(tgt_ref)

    det_p = ap * dp - bp * bp
    det_t = at * dt_ - bt * bt

    dx = px - tx
    dy = py - ty
    inv_det_p = 1.0 / det_p

    # 0.5 * dxy^T Sigma_p^{-1} dxy   (Sigma_p^{-1} = adj / det, as in torch code)
    xy_dist = 0.5 * (dp * dx * dx - 2.0 * bp * dx * dy + ap * dy * dy) * inv_det_p
    # 0.5 * tr(Sigma_p^{-1} Sigma_t)
    trace = (dp * at - 2.0 * bp * bt + ap * dt_) * inv_det_p
    whr = (0.5 * trace
           + 0.5 * jnp.log(jnp.maximum(det_p, EPS) / jnp.maximum(det_t, EPS))
           - 1.0)

    dist = xy_dist * (1.0 / (ALPHA * ALPHA)) + whr
    dist = jnp.sqrt(jnp.maximum(dist, EPS))          # fun='sqrt'

    kld_ref[...] = dist
    loss_ref[...] = 1.0 - 1.0 / (TAF + dist)


def kld_loss_new_forward(pred, target):
    """pred, target: (..., 5) float32 xywhr boxes. Returns (kld_loss, kld), each (N,)."""
    pred = jnp.reshape(pred, (-1, 5)).astype(jnp.float32)
    target = jnp.reshape(target, (-1, 5)).astype(jnp.float32)
    assert pred.shape == target.shape
    N = pred.shape[0]

    nrows_raw = -(-N // LANE)                 # ceil(N / 128)
    tm = min(TM_MAX, max(nrows_raw, 1))       # sublane rows per grid step
    nrows = -(-nrows_raw // tm) * tm          # pad rows to a multiple of tm
    npad = nrows * LANE
    grid = (nrows // tm,)

    def prep(x):
        # Pad with benign unit boxes (w=h=1) then repack feature-major:
        # (Npad, 5) -> (nrows, 128, 5) -> (5, nrows, 128).
        x = jnp.pad(x, ((0, npad - N), (0, 0)), constant_values=1.0)
        return jnp.transpose(x.reshape(nrows, LANE, 5), (2, 0, 1))

    p = prep(pred)
    t = prep(target)

    cost = pl.CostEstimate(flops=70 * npad,
                           transcendentals=8 * npad,
                           bytes_accessed=48 * npad)

    loss, kld = pl.pallas_call(
        _kld_kernel,
        out_shape=(jax.ShapeDtypeStruct((nrows, LANE), jnp.float32),
                   jax.ShapeDtypeStruct((nrows, LANE), jnp.float32)),
        grid=grid,
        in_specs=[pl.BlockSpec((5, tm, LANE), lambda i: (0, i, 0)),
                  pl.BlockSpec((5, tm, LANE), lambda i: (0, i, 0))],
        out_specs=(pl.BlockSpec((tm, LANE), lambda i: (i, 0)),
                   pl.BlockSpec((tm, LANE), lambda i: (i, 0))),
        compiler_params=pltpu.CompilerParams(
            dimension_semantics=("parallel",)),
        cost_estimate=cost,
    )(p, t)

    return loss.reshape(npad)[:N], kld.reshape(npad)[:N]


def _reference(pred, target):
    """Pure-JAX reference mirroring KLDloss_new.KLD_compute + forward (reduction='none')."""
    def xy_sigma(x):
        xy = x[..., :2]
        wh = jnp.clip(x[..., 2:4], WH_MIN, WH_MAX)
        r = x[..., 4]
        c, s = jnp.cos(r), jnp.sin(r)
        R = jnp.stack([jnp.stack([c, -s], -1), jnp.stack([s, c], -1)], -2)
        S = 0.5 * jax.vmap(jnp.diag)(wh)
        sigma = R @ (S ** 2) @ jnp.swapaxes(R, -1, -2)
        return xy, sigma

    xy_p, Sp = xy_sigma(pred)
    xy_t, St = xy_sigma(target)
    det_p = Sp[:, 0, 0] * Sp[:, 1, 1] - Sp[:, 0, 1] * Sp[:, 1, 0]
    det_t = St[:, 0, 0] * St[:, 1, 1] - St[:, 0, 1] * St[:, 1, 0]
    adj = jnp.stack([jnp.stack([Sp[:, 1, 1], -Sp[:, 0, 1]], -1),
                     jnp.stack([-Sp[:, 1, 0], Sp[:, 0, 0]], -1)], -2)
    Sp_inv = adj / det_p[:, None, None]
    dxy = (xy_p - xy_t)[:, :, None]
    xy_dist = 0.5 * (jnp.swapaxes(dxy, -1, -2) @ Sp_inv @ dxy)[:, 0, 0]
    whr = 0.5 * jnp.trace(Sp_inv @ St, axis1=-2, axis2=-1)
    whr = whr + 0.5 * (jnp.log(jnp.maximum(det_p, EPS)) - jnp.log(jnp.maximum(det_t, EPS))) - 1.0
    dist = xy_dist / (ALPHA * ALPHA) + whr
    kld = jnp.sqrt(jnp.maximum(dist, EPS))
    return 1.0 - 1.0 / (TAF + kld), kld


def _make_boxes(key, n):
    kxy, kwh, kr = jax.random.split(key, 3)
    xy = jax.random.uniform(kxy, (n, 2), jnp.float32, 0.0, 32.0)
    wh = jax.random.uniform(kwh, (n, 2), jnp.float32, 1.0, 8.0)
    r = jax.random.uniform(kr, (n, 1), jnp.float32, -3.0, 3.0)
    return jnp.concatenate([xy, wh, r], axis=-1)


if __name__ == "__main__":
    key = jax.random.PRNGKey(0)

    ok = True
    for n in (8, 300):   # single-vreg case and multi-row padded case
        key, kp, kt = jax.random.split(key, 3)
        pred = _make_boxes(kp, n)
        target = _make_boxes(kt, n)

        loss, kld = kld_loss_new_forward(pred, target)
        jax.block_until_ready((loss, kld))

        ref_loss, ref_kld = _reference(pred, target)
        ok &= bool(jnp.allclose(loss, ref_loss, rtol=1e-4, atol=1e-5))
        ok &= bool(jnp.allclose(kld, ref_kld, rtol=1e-4, atol=1e-5))

    assert ok, "mismatch vs pure-JAX reference"
    print("KERNEL_OK")
</pallas_src>

<mosaic_0001>
module attributes {stable_mosaic.version = 11 : i64} {
  func.func @_kld_kernel(%arg0: i32, %arg1: memref<5x1x128xf32, #tpu.memory_space<vmem>>, %arg2: memref<5x1x128xf32, #tpu.memory_space<vmem>>, %arg3: memref<1x128xf32, #tpu.memory_space<vmem>>, %arg4: memref<1x128xf32, #tpu.memory_space<vmem>>) attributes {dimension_semantics = [#tpu.dimension_semantics<parallel>], iteration_bounds = array<i64: 1>, scalar_prefetch = 0 : i64, scratch_operands = 0 : i64, tpu.core_type = #tpu.core_type<tc>, window_params = [{transform_indices = @transform_0, window_bounds = array<i64: 5, 1, 128>}, {transform_indices = @transform_1, window_bounds = array<i64: 5, 1, 128>}, {transform_indices = @transform_2, window_bounds = array<i64: 1, 128>}, {transform_indices = @transform_3, window_bounds = array<i64: 1, 128>}]} {
    %c0 = arith.constant 0 : index
    %c0_0 = arith.constant 0 : index
    %c0_1 = arith.constant 0 : index
    %0 = vector.load %arg1[%c0, %c0_0, %c0_1] : memref<5x1x128xf32, #tpu.memory_space<vmem>>, vector<1x1x128xf32>
    %1 = vector.shape_cast %0 : vector<1x1x128xf32> to vector<1x128xf32>
    %c1 = arith.constant 1 : index
    %c0_2 = arith.constant 0 : index
    %c0_3 = arith.constant 0 : index
    %2 = vector.load %arg1[%c1, %c0_2, %c0_3] : memref<5x1x128xf32, #tpu.memory_space<vmem>>, vector<1x1x128xf32>
    %3 = vector.shape_cast %2 : vector<1x1x128xf32> to vector<1x128xf32>
    %c2 = arith.constant 2 : index
    %c0_4 = arith.constant 0 : index
    %c0_5 = arith.constant 0 : index
    %4 = vector.load %arg1[%c2, %c0_4, %c0_5] : memref<5x1x128xf32, #tpu.memory_space<vmem>>, vector<1x1x128xf32>
    %5 = vector.shape_cast %4 : vector<1x1x128xf32> to vector<1x128xf32>
    %cst = arith.constant 1.000000e-07 : f32
    %cst_6 = arith.constant 1.000000e+07 : f32
    %6 = vector.broadcast %cst : f32 to vector<1x128xf32>
    %7 = arith.maximumf %6, %5 : vector<1x128xf32>
    %8 = vector.broadcast %cst_6 : f32 to vector<1x128xf32>
    %9 = arith.minimumf %8, %7 : vector<1x128xf32>
    %c3 = arith.constant 3 : index
    %c0_7 = arith.constant 0 : index
    %c0_8 = arith.constant 0 : index
    %10 = vector.load %arg1[%c3, %c0_7, %c0_8] : memref<5x1x128xf32, #tpu.memory_space<vmem>>, vector<1x1x128xf32>
    %11 = vector.shape_cast %10 : vector<1x1x128xf32> to vector<1x128xf32>
    %cst_9 = arith.constant 1.000000e-07 : f32
    %cst_10 = arith.constant 1.000000e+07 : f32
    %12 = vector.broadcast %cst_9 : f32 to vector<1x128xf32>
    %13 = arith.maximumf %12, %11 : vector<1x128xf32>
    %14 = vector.broadcast %cst_10 : f32 to vector<1x128xf32>
    %15 = arith.minimumf %14, %13 : vector<1x128xf32>
    %c4 = arith.constant 4 : index
    %c0_11 = arith.constant 0 : index
    %c0_12 = arith.constant 0 : index
    %16 = vector.load %arg1[%c4, %c0_11, %c0_12] : memref<5x1x128xf32, #tpu.memory_space<vmem>>, vector<1x1x128xf32>
    %17 = vector.shape_cast %16 : vector<1x1x128xf32> to vector<1x128xf32>
    %cst_13 = arith.constant 2.500000e-01 : f32
    %18 = vector.broadcast %cst_13 : f32 to vector<1x128xf32>
    %19 = arith.mulf %18, %9 : vector<1x128xf32>
    %20 = arith.mulf %19, %9 : vector<1x128xf32>
    %cst_14 = arith.constant 2.500000e-01 : f32
    %21 = vector.broadcast %cst_14 : f32 to vector<1x128xf32>
    %22 = arith.mulf %21, %15 : vector<1x128xf32>
    %23 = arith.mulf %22, %15 : vector<1x128xf32>
    %24 = arith.addf %20, %23 : vector<1x128xf32>
    %cst_15 = arith.constant 5.000000e-01 : f32
    %25 = vector.broadcast %cst_15 : f32 to vector<1x128xf32>
    %26 = arith.mulf %25, %24 : vector<1x128xf32>
    %27 = arith.subf %20, %23 : vector<1x128xf32>
    %cst_16 = arith.constant 5.000000e-01 : f32
    %28 = vector.broadcast %cst_16 : f32 to vector<1x128xf32>
    %29 = arith.mulf %28, %27 : vector<1x128xf32>
    %cst_17 = arith.constant 2.000000e+00 : f32
    %30 = vector.broadcast %cst_17 : f32 to vector<1x128xf32>
    %31 = arith.mulf %30, %17 : vector<1x128xf32>
    %32 = math.cos %31 : vector<1x128xf32>
    %cst_18 = arith.constant 2.000000e+00 : f32
    %33 = vector.broadcast %cst_18 : f32 to vector<1x128xf32>
    %34 = arith.mulf %33, %17 : vector<1x128xf32>
    %35 = math.sin %34 : vector<1x128xf32>
    %36 = arith.mulf %29, %32 : vector<1x128xf32>
    %37 = arith.addf %26, %36 : vector<1x128xf32>
    %38 = arith.mulf %29, %35 : vector<1x128xf32>
    %39 = arith.mulf %29, %32 : vector<1x128xf32>
    %40 = arith.subf %26, %39 : vector<1x128xf32>
    %c0_19 = arith.constant 0 : index
    %c0_20 = arith.constant 0 : index
    %c0_21 = arith.constant 0 : index
    %41 = vector.load %arg2[%c0_19, %c0_20, %c0_21] : memref<5x1x128xf32, #tpu.memory_space<vmem>>, vector<1x1x128xf32>
    %42 = vector.shape_cast %41 : vector<1x1x128xf32> to vector<1x128xf32>
    %c1_22 = arith.constant 1 : index
    %c0_23 = arith.constant 0 : index
    %c0_24 = arith.constant 0 : index
    %43 = vector.load %arg2[%c1_22, %c0_23, %c0_24] : memref<5x1x128xf32, #tpu.memory_space<vmem>>, vector<1x1x128xf32>
    %44 = vector.shape_cast %43 : vector<1x1x128xf32> to vector<1x128xf32>
    %c2_25 = arith.constant 2 : index
    %c0_26 = arith.constant 0 : index
    %c0_27 = arith.constant 0 : index
    %45 = vector.load %arg2[%c2_25, %c0_26, %c0_27] : memref<5x1x128xf32, #tpu.memory_space<vmem>>, vector<1x1x128xf32>
    %46 = vector.shape_cast %45 : vector<1x1x128xf32> to vector<1x128xf32>
    %cst_28 = arith.constant 1.000000e-07 : f32
    %cst_29 = arith.constant 1.000000e+07 : f32
    %47 = vector.broadcast %cst_28 : f32 to vector<1x128xf32>
    %48 = arith.maximumf %47, %46 : vector<1x128xf32>
    %49 = vector.broadcast %cst_29 : f32 to vector<1x128xf32>
    %50 = arith.minimumf %49, %48 : vector<1x128xf32>
    %c3_30 = arith.constant 3 : index
    %c0_31 = arith.constant 0 : index
    %c0_32 = arith.constant 0 : index
    %51 = vector.load %arg2[%c3_30, %c0_31, %c0_32] : memref<5x1x128xf32, #tpu.memory_space<vmem>>, vector<1x1x128xf32>
    %52 = vector.shape_cast %51 : vector<1x1x128xf32> to vector<1x128xf32>
    %cst_33 = arith.constant 1.000000e-07 : f32
    %cst_34 = arith.constant 1.000000e+07 : f32
    %53 = vector.broadcast %cst_33 : f32 to vector<1x128xf32>
    %54 = arith.maximumf %53, %52 : vector<1x128xf32>
    %55 = vector.broadcast %cst_34 : f32 to vector<1x128xf32>
    %56 = arith.minimumf %55, %54 : vector<1x128xf32>
    %c4_35 = arith.constant 4 : index
    %c0_36 = arith.constant 0 : index
    %c0_37 = arith.constant 0 : index
    %57 = vector.load %arg2[%c4_35, %c0_36, %c0_37] : memref<5x1x128xf32, #tpu.memory_space<vmem>>, vector<1x1x128xf32>
    %58 = vector.shape_cast %57 : vector<1x1x128xf32> to vector<1x128xf32>
    %cst_38 = arith.constant 2.500000e-01 : f32
    %59 = vector.broadcast %cst_38 : f32 to vector<1x128xf32>
    %60 = arith.mulf %59, %50 : vector<1x128xf32>
    %61 = arith.mulf %60, %50 : vector<1x128xf32>
    %cst_39 = arith.constant 2.500000e-01 : f32
    %62 = vector.broadcast %cst_39 : f32 to vector<1x128xf32>
    %63 = arith.mulf %62, %56 : vector<1x128xf32>
    %64 = arith.mulf %63, %56 : vector<1x128xf32>
    %65 = arith.addf %61, %64 : vector<1x128xf32>
    %cst_40 = arith.constant 5.000000e-01 : f32
    %66 = vector.broadcast %cst_40 : f32 to vector<1x128xf32>
    %67 = arith.mulf %66, %65 : vector<1x128xf32>
    %68 = arith.subf %61, %64 : vector<1x128xf32>
    %cst_41 = arith.constant 5.000000e-01 : f32
    %69 = vector.broadcast %cst_41 : f32 to vector<1x128xf32>
    %70 = arith.mulf %69, %68 : vector<1x128xf32>
    %cst_42 = arith.constant 2.000000e+00 : f32
    %71 = vector.broadcast %cst_42 : f32 to vector<1x128xf32>
    %72 = arith.mulf %71, %58 : vector<1x128xf32>
    %73 = math.cos %72 : vector<1x128xf32>
    %cst_43 = arith.constant 2.000000e+00 : f32
    %74 = vector.broadcast %cst_43 : f32 to vector<1x128xf32>
    %75 = arith.mulf %74, %58 : vector<1x128xf32>
    %76 = math.sin %75 : vector<1x128xf32>
    %77 = arith.mulf %70, %73 : vector<1x128xf32>
    %78 = arith.addf %67, %77 : vector<1x128xf32>
    %79 = arith.mulf %70, %76 : vector<1x128xf32>
    %80 = arith.mulf %70, %73 : vector<1x128xf32>
    %81 = arith.subf %67, %80 : vector<1x128xf32>
    %82 = arith.mulf %37, %40 : vector<1x128xf32>
    %83 = arith.mulf %38, %38 : vector<1x128xf32>
    %84 = arith.subf %82, %83 : vector<1x128xf32>
    %85 = arith.mulf %78, %81 : vector<1x128xf32>
    %86 = arith.mulf %79, %79 : vector<1x128xf32>
    %87 = arith.subf %85, %86 : vector<1x128xf32>
    %88 = arith.subf %1, %42 : vector<1x128xf32>
    %89 = arith.subf %3, %44 : vector<1x128xf32>
    %cst_44 = arith.constant 1.000000e+00 : f32
    %90 = vector.broadcast %cst_44 : f32 to vector<1x128xf32>
    %91 = arith.divf %90, %84 : vector<1x128xf32>
    %92 = arith.mulf %40, %88 : vector<1x128xf32>
    %93 = arith.mulf %92, %88 : vector<1x128xf32>
    %cst_45 = arith.constant 2.000000e+00 : f32
    %94 = vector.broadcast %cst_45 : f32 to vector<1x128xf32>
    %95 = arith.mulf %94, %38 : vector<1x128xf32>
    %96 = arith.mulf %95, %88 : vector<1x128xf32>
    %97 = arith.mulf %96, %89 : vector<1x128xf32>
    %98 = arith.subf %93, %97 : vector<1x128xf32>
    %99 = arith.mulf %37, %89 : vector<1x128xf32>
    %100 = arith.mulf %99, %89 : vector<1x128xf32>
    %101 = arith.addf %98, %100 : vector<1x128xf32>
    %cst_46 = arith.constant 5.000000e-01 : f32
    %102 = vector.broadcast %cst_46 : f32 to vector<1x128xf32>
    %103 = arith.mulf %102, %101 : vector<1x128xf32>
    %104 = arith.mulf %103, %91 : vector<1x128xf32>
    %105 = arith.mulf %40, %78 : vector<1x128xf32>
    %cst_47 = arith.constant 2.000000e+00 : f32
    %106 = vector.broadcast %cst_47 : f32 to vector<1x128xf32>
    %107 = arith.mulf %106, %38 : vector<1x128xf32>
    %108 = arith.mulf %107, %79 : vector<1x128xf32>
    %109 = arith.subf %105, %108 : vector<1x128xf32>
    %110 = arith.mulf %37, %81 : vector<1x128xf32>
    %111 = arith.addf %109, %110 : vector<1x128xf32>
    %112 = arith.mulf %111, %91 : vector<1x128xf32>
    %cst_48 = arith.constant 5.000000e-01 : f32
    %113 = vector.broadcast %cst_48 : f32 to vector<1x128xf32>
    %114 = arith.mulf %113, %112 : vector<1x128xf32>
    %cst_49 = arith.constant 1.000000e-07 : f32
    %115 = vector.broadcast %cst_49 : f32 to vector<1x128xf32>
    %116 = arith.maximumf %84, %115 : vector<1x128xf32>
    %cst_50 = arith.constant 1.000000e-07 : f32
    %117 = vector.broadcast %cst_50 : f32 to vector<1x128xf32>
    %118 = arith.maximumf %87, %117 : vector<1x128xf32>
    %119 = arith.divf %116, %118 : vector<1x128xf32>
    %120 = math.log %119 : vector<1x128xf32>
    %cst_51 = arith.constant 5.000000e-01 : f32
    %121 = vector.broadcast %cst_51 : f32 to vector<1x128xf32>
    %122 = arith.mulf %121, %120 : vector<1x128xf32>
    %123 = arith.addf %114, %122 : vector<1x128xf32>
    %cst_52 = arith.constant 1.000000e+00 : f32
    %124 = vector.broadcast %cst_52 : f32 to vector<1x128xf32>
    %125 = arith.subf %123, %124 : vector<1x128xf32>
    %cst_53 = arith.constant 1.000000e+00 : f32
    %126 = vector.broadcast %cst_53 : f32 to vector<1x128xf32>
    %127 = arith.mulf %104, %126 : vector<1x128xf32>
    %128 = arith.addf %127, %125 : vector<1x128xf32>
    %cst_54 = arith.constant 1.000000e-07 : f32
    %129 = vector.broadcast %cst_54 : f32 to vector<1x128xf32>
    %130 = arith.maximumf %128, %129 : vector<1x128xf32>
    %131 = math.sqrt %130 : vector<1x128xf32>
    %c0_55 = arith.constant 0 : index
    %c0_56 = arith.constant 0 : index
    %132 = vector.load %arg4[%c0_55, %c0_56] : memref<1x128xf32, #tpu.memory_space<vmem>>, vector<1x128xf32>
    tpu.vector_store %arg4[%c0_55, %c0_56], %131 {strides = array<i32>} : memref<1x128xf32, #tpu.memory_space<vmem>>, vector<1x128xf32>,
    %cst_57 = arith.constant 2.000000e+00 : f32
    %133 = vector.broadcast %cst_57 : f32 to vector<1x128xf32>
    %134 = arith.addf %133, %131 : vector<1x128xf32>
    %cst_58 = arith.constant 1.000000e+00 : f32
    %135 = vector.broadcast %cst_58 : f32 to vector<1x128xf32>
    %136 = arith.divf %135, %134 : vector<1x128xf32>
    %cst_59 = arith.constant 1.000000e+00 : f32
    %137 = vector.broadcast %cst_59 : f32 to vector<1x128xf32>
    %138 = arith.subf %137, %136 : vector<1x128xf32>
    %c0_60 = arith.constant 0 : index
    %c0_61 = arith.constant 0 : index
    %139 = vector.load %arg3[%c0_60, %c0_61] : memref<1x128xf32, #tpu.memory_space<vmem>>, vector<1x128xf32>
    tpu.vector_store %arg3[%c0_60, %c0_61], %138 {strides = array<i32>} : memref<1x128xf32, #tpu.memory_space<vmem>>, vector<1x128xf32>,
    return
  }
  func.func @transform_0(%arg0: i32) -> (i32, i32, i32) {
    %c0_i32 = arith.constant 0 : i32
    %c0_i32_0 = arith.constant 0 : i32
    %c0_i32_1 = arith.constant 0 : i32
    return %c0_i32, %arg0, %c0_i32_0 : i32, i32, i32
  }
  func.func @transform_1(%arg0: i32) -> (i32, i32, i32) {
    %c0_i32 = arith.constant 0 : i32
    %c0_i32_0 = arith.constant 0 : i32
    %c0_i32_1 = arith.constant 0 : i32
    return %c0_i32, %arg0, %c0_i32_0 : i32, i32, i32
  }
  func.func @transform_2(%arg0: i32) -> (i32, i32) {
    %c0_i32 = arith.constant 0 : i32
    %c0_i32_0 = arith.constant 0 : i32
    return %arg0, %c0_i32 : i32, i32
  }
  func.func @transform_3(%arg0: i32) -> (i32, i32) {
    %c0_i32 = arith.constant 0 : i32
    %c0_i32_0 = arith.constant 0 : i32
    return %arg0, %c0_i32 : i32, i32
  }
}

</mosaic_0001>

<llo_original>
// kernel: tpu_custom_call.1
$region0: #{tpu_custom_call.1}
  #allocation0 [shape = 'u32[]', space=smem, size = 0x4, offset = 0x4, fixed_abs, tag = 'smem constant byte address 0x4 - core index']
  #allocation1 [shape = 'u32[72,128]{1,0:T(1,128)}', space=vmem, size = 0x9000, scoped, tag = 'internal scratch']
  %s0 = inlined_call_operand.hbm [shape: f32[5,1,128], index: 0, kind: input, shape index: {}]
  %s1 = inlined_call_operand.hbm [shape: f32[5,1,128], index: 1, kind: input, shape index: {}]
  %s2 = inlined_call_operand.hbm [shape: f32[1,128], index: 2, kind: output, shape index: {0}]
  %s3 = inlined_call_operand.hbm [shape: f32[1,128], index: 3, kind: output, shape index: {1}]
  %4 = xla_tuple %s2, %s3
  %s5 = sld [smem:[#allocation0]]
  $region34: #{tpu_custom_call.1} parent=0
    _
  %s7 = ssub.s32 1, %s5
  %s8 = scalar_select 0, %s7, %s5
  $region1: #{tpu_custom_call.1} parent=0
    #allocation2 [shape = 'u8[2560]{0}', space=vmem, size = 0xc00, scoped, tag = 'input window, operand 0, single buffered']
    #allocation3 [shape = 's32[1]{0}', space=sflag, size = 0x4, scoped, tag = 'scoped memory for tpu_custom_call.1']
    #allocation4 [shape = 's32[1]{0}', space=sflag, size = 0x4, scoped, tag = 'scoped memory for tpu_custom_call.1']
    #allocation5 [shape = 'u8[2560]{0}', space=vmem, size = 0xc00, scoped, tag = 'input window, operand 1, single buffered']
    #allocation6 [shape = 's32[1]{0}', space=sflag, size = 0x4, scoped, tag = 'scoped memory for tpu_custom_call.1']
    #allocation7 [shape = 'u8[512]{0}', space=vmem, size = 0x400, scoped, tag = 'output window, operand 0, single buffered']
    #allocation8 [shape = 'u8[512]{0}', space=vmem, size = 0x400, scoped, tag = 'output window, operand 1, single buffered']
    #allocation9 [shape = 's32[1]{0}', space=sflag, size = 0x4, scoped, tag = 'scoped memory for tpu_custom_call.1']
    %9 = vsyncpa [#allocation3], 0
    %10 = vsyncpa [#allocation6], 0
    %11 = vsyncpa [#allocation4], 0
    %12 = vsyncpa [#allocation9], 0
    // Predicated region
    $region2: #{tpu_custom_call.1} parent=1 // pred_check
      _
    $region3: #{tpu_custom_call.1} parent=1 // pred_check_branch
      %14 = sbr.rel (0) target = $region5
    $region4: #{tpu_custom_call.1} parent=1 // pred_region
      %16 = vsyncadd [#allocation3], 0
      %s17 = sshll.u32 %s0, 4
      %s18 = int_to_ptr.hbm [resolvable:$true] %s17
      %s19 = sshll.u32 [#allocation2], 4
      %s20 = int_to_ptr.vmem [resolvable:$true] %s19
      %25 = dma.hbm_to_vmem [thread:$0]  %s18, 80, %s20, [#allocation3], 16, 16, 1
    $region5: #{tpu_custom_call.1} parent=1 // pred_fallthru
      _
    // Predicated region
    $region6: #{tpu_custom_call.1} parent=1 // pred_check
      _
    $region7: #{tpu_custom_call.1} parent=1 // pred_check_branch
      %27 = sbr.rel (0) target = $region9
    $region8: #{tpu_custom_call.1} parent=1 // pred_region
      %29 = vsyncadd [#allocation6], 0
      %s30 = sshll.u32 %s1, 4
      %s31 = int_to_ptr.hbm [resolvable:$true] %s30
      %s32 = sshll.u32 [#allocation5], 4
      %s33 = int_to_ptr.vmem [resolvable:$true] %s32
      %38 = dma.hbm_to_vmem [thread:$0]  %s31, 80, %s33, [#allocation6], 16, 16, 1
    $region9: #{tpu_custom_call.1} parent=1 // pred_fallthru
      _
    // Predicated region
    $region10: #{tpu_custom_call.1} parent=1 // pred_check
      _
    $region11: #{tpu_custom_call.1} parent=1 // pred_check_branch
      %40 = sbr.rel (0) target = $region13
    $region12: #{tpu_custom_call.1} parent=1 // pred_region
      %42 = dma.done [#allocation3], 80
    $region13: #{tpu_custom_call.1} parent=1 // pred_fallthru
      _
    // Predicated region
    $region14: #{tpu_custom_call.1} parent=1 // pred_check
      _
    $region15: #{tpu_custom_call.1} parent=1 // pred_check_branch
      %44 = sbr.rel (0) target = $region17
    $region16: #{tpu_custom_call.1} parent=1 // pred_region
      %46 = dma.done [#allocation6], 80
    $region17: #{tpu_custom_call.1} parent=1 // pred_fallthru
      _
    %v47 = vld [vmem:[#allocation2] sm:$0x1]
    %s48 = scalar_lea.vmem [#allocation2], 1
    %v49 = vld [vmem:[%s48] sm:$0x1]
    %s50 = scalar_lea.vmem [#allocation2], 2
    %v51 = vld [vmem:[%s50] sm:$0x1]
    %v52 = vmax.f32 %v51, 1e-07
    %v53 = vmin.f32 %v52, 10000000.0
    %s54 = scalar_lea.vmem [#allocation2], 3
    %v55 = vld [vmem:[%s54] sm:$0x1]
    %v56 = vmax.f32 %v55, 1e-07
    %v57 = vmin.f32 %v56, 10000000.0
    %s58 = scalar_lea.vmem [#allocation2], 4
    %v59 = vld [vmem:[%s58] sm:$0x1]
    %v60 = vmul.f32 %v53, 0.25
    %v61 = vmul.f32 %v60, %v53
    %v62 = vmul.f32 %v57, 0.25
    %v63 = vmul.f32 %v62, %v57
    %v64 = vadd.f32 %v61, %v63
    %v65 = vmul.f32 %v64, 0.5
    %v66 = vsub.f32 %v61, %v63
    %v67 = vmul.f32 %v66, 0.5
    %v68 = vmul.f32 %v59, 2.0
    %v69 = vand.u32 2147483647, %v68
    %vm70 = vcmp.le.f32.partialorder %v69, 0.7853982
    %vm71 = vcmp.lt.s32.totalorder %v68, 0
    %v72 = vand.u32 %v68, 2139095040
    %v73 = vshrl.u32 %v72, 23
    %v74 = vsub.s32 %v73, 127
    %v75 = vand.u32 2147483647, %v68
    %v76 = vand.u32 %v75, 8388607
    %v77 = vor.u32 %v76, 8388608
    %v78 = vsub.s32 0, %v77
    %v79 = vadd.s32 %v74, 1
    %vm80 = vcmp.gt.s32.totalorder %v79, 0
    %v81 = vsel %vm80, %v79, 0
    %v82 = vshrl.u32 %v81, 5
    %v83 = vand.u32 %v81, 31
    %v84 = vsub.s32 32, %v83
    %v85 = vshrl.u32 683565275, %v84
    %v86 = vshll.u32 683565275, %v83
    %v87 = vshrl.u32 2475754826, %v84
    %v88 = vor.u32 %v86, %v87
    %v89 = vshll.u32 2475754826, %v83
    %v90 = vshrl.u32 2131351028, %v84
    %v91 = vor.u32 %v89, %v90
    %v92 = vshll.u32 2131351028, %v83
    %v93 = vshrl.u32 2102212464, %v84
    %v94 = vor.u32 %v92, %v93
    %v95 = vshll.u32 2102212464, %v83
    %v96 = vshrl.u32 920167782, %v84
    %v97 = vor.u32 %v95, %v96
    %v98 = vshll.u32 920167782, %v83
    %v99 = vshrl.u32 1326507024, %v84
    %v100 = vor.u32 %v98, %v99
    %vm101 = vcmp.lt.s32.totalorder %v82, 1
    %vm102 = vcmp.lt.s32.totalorder %v82, 2
    %vm103 = vcmp.lt.s32.totalorder %v82, 3
    %vm104 = vcmp.lt.s32.totalorder %v82, 4
    %v105 = vsel %vm101, %v85, %v88
    %v106 = vsel %vm104, %v94, 2102212464
    %v107 = vsel %vm103, %v91, %v106
    %v108 = vsel %vm102, %v105, %v107
    %v109 = vsel %vm101, %v88, %v91
    %v110 = vsel %vm104, %v97, 920167782
    %v111 = vsel %vm103, %v94, %v110
    %v112 = vsel %vm102, %v109, %v111
    %v113 = vsel %vm101, %v91, %v94
    %v114 = vsel %vm104, %v100, 1326507024
    %v115 = vsel %vm103, %v97, %v114
    %v116 = vsel %vm102, %v113, %v115
    %v117 = vshll.u32 %v77, 8
    %v118 = vand.u32 %v117, 65535
    %v119 = vshrl.u32 %v117, 16
    %v120 = vand.u32 %v116, 65535
    %v121 = vshrl.u32 %v116, 16
    %v122 = vmul.u32 %v118, %v120
    %v123 = vmul.u32 %v118, %v121
    %v124 = vmul.u32 %v119, %v120
    %v125 = vmul.u32 %v119, %v121
    %v126 = vshll.u32 %v123, 16
    %v127 = vshrl.u32 %v123, 16
    %v128 = vshll.u32 %v124, 16
    %v129 = vshrl.u32 %v124, 16
    %vm130 = vc.u32 %v122, %v126
    %v131 = vsel %vm130, 1, 0
    %v132 = vadd.s32 %v122, %v126
    %v133 = vadd.s32 %v125, %v131
    %vm134 = vc.u32 %v132, %v128
    %v135 = vsel %vm134, 1, 0
    %v136 = vadd.s32 %v132, %v128
    %v137 = vadd.s32 %v133, %v135
    %v138 = vadd.s32 %v137, %v127
    %v139 = vadd.s32 %v138, %v129
    %v140 = vand.u32 %v117, 65535
    %v141 = vshrl.u32 %v117, 16
    %v142 = vand.u32 %v112, 65535
    %v143 = vshrl.u32 %v112, 16
    %v144 = vmul.u32 %v140, %v142
    %v145 = vmul.u32 %v140, %v143
    %v146 = vmul.u32 %v141, %v142
    %v147 = vmul.u32 %v141, %v143
    %v148 = vshll.u32 %v145, 16
    %v149 = vshrl.u32 %v145, 16
    %v150 = vshll.u32 %v146, 16
    %v151 = vshrl.u32 %v146, 16
    %vm152 = vc.u32 %v144, %v148
    %v153 = vsel %vm152, 1, 0
    %v154 = vadd.s32 %v144, %v148
    %v155 = vadd.s32 %v147, %v153
    %vm156 = vc.u32 %v154, %v150
    %v157 = vsel %vm156, 1, 0
    %v158 = vadd.s32 %v154, %v150
    %v159 = vadd.s32 %v155, %v157
    %v160 = vadd.s32 %v159, %v149
    %v161 = vadd.s32 %v160, %v151
    %v162 = vmul.u32 %v117, %v108
    %v163 = vadd.s32 %v139, %v158
    %vm164 = vc.u32 %v139, %v158
    %v165 = vadd.s32 %v161, 1
    %v166 = vsel %vm164, %v165, %v161
    %v167 = vadd.s32 %v162, %v166
    %v168 = vadd.s32 %v167, 536870912
    %v169 = vshrl.u32 %v168, 30
    %v170 = vshll.u32 %v169, 30
    %v171 = vsub.s32 %v167, %v170
    %vm172 = vcmp.lt.s32.totalorder %v171, 0
    %v173 = vsub.s32 0, %v171
    %v174 = vsel %vm172, %v173, %v171
    %v175 = vclz %v174
    %v176 = vsub.s32 %v175, 2
    %vm177 = vcmp.gt.s32.totalorder 0, %v176
    %v178 = vsel %vm177, 0, %v176
    %v179 = vsub.s32 32, %v178
    %v180 = vshll.u32 %v171, %v178
    %v181 = vshrl.u32 %v163, %v179
    %v182 = vor.u32 %v180, %v181
    %v183 = vsub.s32 4294967266, %v178
    %v184 = vadd.s32 %v183, 127
    %v185 = vshll.u32 %v184, 23
    %v186 = vor.u32 4788187, %v185
    %v187 = vand.u32 2147483647, %v186
    %v189 = vcvt.s32.f32 %v182
    %v190 = vmul.f32 %v189, %v187
    %v191 = vxor.u32 %v190, 2147483648
    %v192 = vsel %vm71, %v191, %v190
    %v193 = vsub.s32 4, %v169
    %v194 = vsel %vm71, %v193, %v169
    %v195 = vsel %vm70, %v68, %v192
    %v196 = vsel %vm70, 0, %v194
    %v197 = vmul.f32 %v195, %v195
    %v198 = vmul.f32 %v197, -0.001358992
    %v199 = vadd.f32 %v198, 0.041655596
    %v200 = vmul.f32 %v197, %v199
    %v201 = vadd.f32 %v200, -0.4999988
    %v202 = vmul.f32 %v197, %v201
    %v203 = vadd.f32 1.0, %v202
    %v204 = vmul.f32 %v195, %v195
    %v205 = vmul.f32 %v204, -0.00019511016
    %v206 = vadd.f32 %v205, 0.008332121
    %v207 = vmul.f32 %v204, %v206
    %v208 = vadd.f32 %v207, -0.16666654
    %v209 = vmul.f32 %v204, %v208
    %v210 = vadd.f32 %v209, 1.0
    %v211 = vmul.f32 %v210, %v195
    %vm212 = vweird.f32 %v68
    %v213 = vand.u32 %v196, 3
    %vm214 = vcmp.lt.s32.totalorder %v213, 2
    %vm215 = vcmp.eq.s32.totalorder %v213, 0
    %v216 = vxor.u32 %v211, 2147483648
    %v217 = vsel %vm215, %v203, %v216
    %vm218 = vcmp.eq.s32.totalorder %v213, 2
    %v219 = vxor.u32 %v203, 2147483648
    %v220 = vsel %vm218, %v219, %v211
    %v221 = vsel %vm214, %v217, %v220
    %v222 = vsel %vm212, nan, %v221
    %v223 = vand.u32 2147483647, %v68
    %vm224 = vcmp.le.f32.partialorder %v223, 0.7853982
    %vm225 = vcmp.lt.s32.totalorder %v68, 0
    %v226 = vand.u32 %v68, 2139095040
    %v227 = vshrl.u32 %v226, 23
    %v228 = vsub.s32 %v227, 127
    %v229 = vand.u32 2147483647, %v68
    %v230 = vand.u32 %v229, 8388607
    %v231 = vor.u32 %v230, 8388608
    %v232 = vsub.s32 0, %v231
    %v233 = vadd.s32 %v228, 1
    %vm234 = vcmp.gt.s32.totalorder %v233, 0
    %v235 = vsel %vm234, %v233, 0
    %v236 = vshrl.u32 %v235, 5
    %v237 = vand.u32 %v235, 31
    %v238 = vsub.s32 32, %v237
    %v239 = vshrl.u32 683565275, %v238
    %v240 = vshll.u32 683565275, %v237
    %v241 = vshrl.u32 2475754826, %v238
    %v242 = vor.u32 %v240, %v241
    %v243 = vshll.u32 2475754826, %v237
    %v244 = vshrl.u32 2131351028, %v238
    %v245 = vor.u32 %v243, %v244
    %v246 = vshll.u32 2131351028, %v237
    %v247 = vshrl.u32 2102212464, %v238
    %v248 = vor.u32 %v246, %v247
    %v249 = vshll.u32 2102212464, %v237
    %v250 = vshrl.u32 920167782, %v238
    %v251 = vor.u32 %v249, %v250
    %v252 = vshll.u32 920167782, %v237
    %v253 = vshrl.u32 1326507024, %v238
    %v254 = vor.u32 %v252, %v253
    %vm255 = vcmp.lt.s32.totalorder %v236, 1
    %vm256 = vcmp.lt.s32.totalorder %v236, 2
    %vm257 = vcmp.lt.s32.totalorder %v236, 3
    %vm258 = vcmp.lt.s32.totalorder %v236, 4
    %v259 = vsel %vm255, %v239, %v242
    %v260 = vsel %vm258, %v248, 2102212464
    %v261 = vsel %vm257, %v245, %v260
    %v262 = vsel %vm256, %v259, %v261
    %v263 = vsel %vm255, %v242, %v245
    %v264 = vsel %vm258, %v251, 920167782
    %v265 = vsel %vm257, %v248, %v264
    %v266 = vsel %vm256, %v263, %v265
    %v267 = vsel %vm255, %v245, %v248
    %v268 = vsel %vm258, %v254, 1326507024
    %v269 = vsel %vm257, %v251, %v268
    %v270 = vsel %vm256, %v267, %v269
    %v271 = vshll.u32 %v231, 8
    %v272 = vand.u32 %v271, 65535
    %v273 = vshrl.u32 %v271, 16
    %v274 = vand.u32 %v270, 65535
    %v275 = vshrl.u32 %v270, 16
    %v276 = vmul.u32 %v272, %v274
    %v277 = vmul.u32 %v272, %v275
    %v278 = vmul.u32 %v273, %v274
    %v279 = vmul.u32 %v273, %v275
    %v280 = vshll.u32 %v277, 16
    %v281 = vshrl.u32 %v277, 16
    %v282 = vshll.u32 %v278, 16
    %v283 = vshrl.u32 %v278, 16
    %vm284 = vc.u32 %v276, %v280
    %v285 = vsel %vm284, 1, 0
    %v286 = vadd.s32 %v276, %v280
    %v287 = vadd.s32 %v279, %v285
    %vm288 = vc.u32 %v286, %v282
    %v289 = vsel %vm288, 1, 0
    %v290 = vadd.s32 %v286, %v282
    %v291 = vadd.s32 %v287, %v289
    %v292 = vadd.s32 %v291, %v281
    %v293 = vadd.s32 %v292, %v283
    %v294 = vand.u32 %v271, 65535
    %v295 = vshrl.u32 %v271, 16
    %v296 = vand.u32 %v266, 65535
    %v297 = vshrl.u32 %v266, 16
    %v298 = vmul.u32 %v294, %v296
    %v299 = vmul.u32 %v294, %v297
    %v300 = vmul.u32 %v295, %v296
    %v301 = vmul.u32 %v295, %v297
    %v302 = vshll.u32 %v299, 16
    %v303 = vshrl.u32 %v299, 16
    %v304 = vshll.u32 %v300, 16
    %v305 = vshrl.u32 %v300, 16
    %vm306 = vc.u32 %v298, %v302
    %v307 = vsel %vm306, 1, 0
    %v308 = vadd.s32 %v298, %v302
    %v309 = vadd.s32 %v301, %v307
    %vm310 = vc.u32 %v308, %v304
    %v311 = vsel %vm310, 1, 0
    %v312 = vadd.s32 %v308, %v304
    %v313 = vadd.s32 %v309, %v311
    %v314 = vadd.s32 %v313, %v303
    %v315 = vadd.s32 %v314, %v305
    %v316 = vmul.u32 %v271, %v262
    %v317 = vadd.s32 %v293, %v312
    %vm318 = vc.u32 %v293, %v312
    %v319 = vadd.s32 %v315, 1
    %v320 = vsel %vm318, %v319, %v315
    %v321 = vadd.s32 %v316, %v320
    %v322 = vadd.s32 %v321, 536870912
    %v323 = vshrl.u32 %v322, 30
    %v324 = vshll.u32 %v323, 30
    %v325 = vsub.s32 %v321, %v324
    %vm326 = vcmp.lt.s32.totalorder %v325, 0
    %v327 = vsub.s32 0, %v325
    %v328 = vsel %vm326, %v327, %v325
    %v329 = vclz %v328
    %v330 = vsub.s32 %v329, 2
    %vm331 = vcmp.gt.s32.totalorder 0, %v330
    %v332 = vsel %vm331, 0, %v330
    %v333 = vsub.s32 32, %v332
    %v334 = vshll.u32 %v325, %v332
    %v335 = vshrl.u32 %v317, %v333
    %v336 = vor.u32 %v334, %v335
    %v337 = vsub.s32 4294967266, %v332
    %v338 = vadd.s32 %v337, 127
    %v339 = vshll.u32 %v338, 23
    %v340 = vor.u32 4788187, %v339
    %v341 = vand.u32 2147483647, %v340
    %v343 = vcvt.s32.f32 %v336
    %v344 = vmul.f32 %v343, %v341
    %v345 = vxor.u32 %v344, 2147483648
    %v346 = vsel %vm225, %v345, %v344
    %v347 = vsub.s32 4, %v323
    %v348 = vsel %vm225, %v347, %v323
    %v349 = vsel %vm224, %v68, %v346
    %v350 = vsel %vm224, 0, %v348
    %v351 = vmul.f32 %v349, %v349
    %v352 = vmul.f32 %v351, -0.001358992
    %v353 = vadd.f32 %v352, 0.041655596
    %v354 = vmul.f32 %v351, %v353
    %v355 = vadd.f32 %v354, -0.4999988
    %v356 = vmul.f32 %v351, %v355
    %v357 = vadd.f32 1.0, %v356
    %v358 = vmul.f32 %v349, %v349
    %v359 = vmul.f32 %v358, -0.00019511016
    %v360 = vadd.f32 %v359, 0.008332121
    %v361 = vmul.f32 %v358, %v360
    %v362 = vadd.f32 %v361, -0.16666654
    %v363 = vmul.f32 %v358, %v362
    %v364 = vadd.f32 %v363, 1.0
    %v365 = vmul.f32 %v364, %v349
    %vm366 = vweird.f32 %v68
    %v367 = vadd.s32 %v350, 3
    %v368 = vand.u32 %v367, 3
    %vm369 = vcmp.lt.s32.totalorder %v368, 2
    %vm370 = vcmp.eq.s32.totalorder %v368, 0
    %v371 = vxor.u32 %v365, 2147483648
    %v372 = vsel %vm370, %v357, %v371
    %vm373 = vcmp.eq.s32.totalorder %v368, 2
    %v374 = vxor.u32 %v357, 2147483648
    %v375 = vsel %vm373, %v374, %v365
    %v376 = vsel %vm369, %v372, %v375
    %v377 = vsel %vm366, nan, %v376
    %v378 = vmul.f32 %v67, %v222
    %v379 = vadd.f32 %v65, %v378
    %v380 = vmul.f32 %v67, %v377
    %v381 = vsub.f32 %v65, %v378
    %v382 = vld [vmem:[#allocation5] sm:$0x1]
    %s383 = scalar_lea.vmem [#allocation5], 1
    %v384 = vld [vmem:[%s383] sm:$0x1]
    %s385 = scalar_lea.vmem [#allocation5], 2
    %v386 = vld [vmem:[%s385] sm:$0x1]
    %v387 = vmax.f32 %v386, 1e-07
    %v388 = vmin.f32 %v387, 10000000.0
    %s389 = scalar_lea.vmem [#allocation5], 3
    %v390 = vld [vmem:[%s389] sm:$0x1]
    %v391 = vmax.f32 %v390, 1e-07
    %v392 = vmin.f32 %v391, 10000000.0
    %s393 = scalar_lea.vmem [#allocation5], 4
    %v394 = vld [vmem:[%s393] sm:$0x1]
    %v395 = vmul.f32 %v388, 0.25
    %v396 = vmul.f32 %v395, %v388
    %v397 = vmul.f32 %v392, 0.25
    %v398 = vmul.f32 %v397, %v392
    %v399 = vadd.f32 %v396, %v398
    %v400 = vmul.f32 %v399, 0.5
    %v401 = vsub.f32 %v396, %v398
    %v402 = vmul.f32 %v401, 0.5
    %v403 = vmul.f32 %v394, 2.0
    %v404 = vand.u32 2147483647, %v403
    %vm405 = vcmp.le.f32.partialorder %v404, 0.7853982
    %vm406 = vcmp.lt.s32.totalorder %v403, 0
    %v407 = vand.u32 %v403, 2139095040
    %v408 = vshrl.u32 %v407, 23
    %v409 = vsub.s32 %v408, 127
    %v410 = vand.u32 2147483647, %v403
    %v411 = vand.u32 %v410, 8388607
    %v412 = vor.u32 %v411, 8388608
    %v413 = vsub.s32 0, %v412
    %v414 = vadd.s32 %v409, 1
    %vm415 = vcmp.gt.s32.totalorder %v414, 0
    %v416 = vsel %vm415, %v414, 0
    %v417 = vshrl.u32 %v416, 5
    %v418 = vand.u32 %v416, 31
    %v419 = vsub.s32 32, %v418
    %v420 = vshrl.u32 683565275, %v419
    %v421 = vshll.u32 683565275, %v418
    %v422 = vshrl.u32 2475754826, %v419
    %v423 = vor.u32 %v421, %v422
    %v424 = vshll.u32 2475754826, %v418
    %v425 = vshrl.u32 2131351028, %v419
    %v426 = vor.u32 %v424, %v425
    %v427 = vshll.u32 2131351028, %v418
    %v428 = vshrl.u32 2102212464, %v419
    %v429 = vor.u32 %v427, %v428
    %v430 = vshll.u32 2102212464, %v418
    %v431 = vshrl.u32 920167782, %v419
    %v432 = vor.u32 %v430, %v431
    %v433 = vshll.u32 920167782, %v418
    %v434 = vshrl.u32 1326507024, %v419
    %v435 = vor.u32 %v433, %v434
    %vm436 = vcmp.lt.s32.totalorder %v417, 1
    %vm437 = vcmp.lt.s32.totalorder %v417, 2
    %vm438 = vcmp.lt.s32.totalorder %v417, 3
    %vm439 = vcmp.lt.s32.totalorder %v417, 4
    %v440 = vsel %vm436, %v420, %v423
    %v441 = vsel %vm439, %v429, 2102212464
    %v442 = vsel %vm438, %v426, %v441
    %v443 = vsel %vm437, %v440, %v442
    %v444 = vsel %vm436, %v423, %v426
    %v445 = vsel %vm439, %v432, 920167782
    %v446 = vsel %vm438, %v429, %v445
    %v447 = vsel %vm437, %v444, %v446
    %v448 = vsel %vm436, %v426, %v429
    %v449 = vsel %vm439, %v435, 1326507024
    %v450 = vsel %vm438, %v432, %v449
    %v451 = vsel %vm437, %v448, %v450
    %v452 = vshll.u32 %v412, 8
    %v453 = vand.u32 %v452, 65535
    %v454 = vshrl.u32 %v452, 16
    %v455 = vand.u32 %v451, 65535
    %v456 = vshrl.u32 %v451, 16
    %v457 = vmul.u32 %v453, %v455
    %v458 = vmul.u32 %v453, %v456
    %v459 = vmul.u32 %v454, %v455
    %v460 = vmul.u32 %v454, %v456
    %v461 = vshll.u32 %v458, 16
    %v462 = vshrl.u32 %v458, 16
    %v463 = vshll.u32 %v459, 16
    %v464 = vshrl.u32 %v459, 16
    %vm465 = vc.u32 %v457, %v461
    %v466 = vsel %vm465, 1, 0
    %v467 = vadd.s32 %v457, %v461
    %v468 = vadd.s32 %v460, %v466
    %vm469 = vc.u32 %v467, %v463
    %v470 = vsel %vm469, 1, 0
    %v471 = vadd.s32 %v467, %v463
    %v472 = vadd.s32 %v468, %v470
    %v473 = vadd.s32 %v472, %v462
    %v474 = vadd.s32 %v473, %v464
    %v475 = vand.u32 %v452, 65535
    %v476 = vshrl.u32 %v452, 16
    %v477 = vand.u32 %v447, 65535
    %v478 = vshrl.u32 %v447, 16
    %v479 = vmul.u32 %v475, %v477
    %v480 = vmul.u32 %v475, %v478
    %v481 = vmul.u32 %v476, %v477
    %v482 = vmul.u32 %v476, %v478
    %v483 = vshll.u32 %v480, 16
    %v484 = vshrl.u32 %v480, 16
    %v485 = vshll.u32 %v481, 16
    %v486 = vshrl.u32 %v481, 16
    %vm487 = vc.u32 %v479, %v483
    %v488 = vsel %vm487, 1, 0
    %v489 = vadd.s32 %v479, %v483
    %v490 = vadd.s32 %v482, %v488
    %vm491 = vc.u32 %v489, %v485
    %v492 = vsel %vm491, 1, 0
    %v493 = vadd.s32 %v489, %v485
    %v494 = vadd.s32 %v490, %v492
    %v495 = vadd.s32 %v494, %v484
    %v496 = vadd.s32 %v495, %v486
    %v497 = vmul.u32 %v452, %v443
    %v498 = vadd.s32 %v474, %v493
    %vm499 = vc.u32 %v474, %v493
    %v500 = vadd.s32 %v496, 1
    %v501 = vsel %vm499, %v500, %v496
    %v502 = vadd.s32 %v497, %v501
    %v503 = vadd.s32 %v502, 536870912
    %v504 = vshrl.u32 %v503, 30
    %v505 = vshll.u32 %v504, 30
    %v506 = vsub.s32 %v502, %v505
    %vm507 = vcmp.lt.s32.totalorder %v506, 0
    %v508 = vsub.s32 0, %v506
    %v509 = vsel %vm507, %v508, %v506
    %v510 = vclz %v509
    %v511 = vsub.s32 %v510, 2
    %vm512 = vcmp.gt.s32.totalorder 0, %v511
    %v513 = vsel %vm512, 0, %v511
    %v514 = vsub.s32 32, %v513
    %v515 = vshll.u32 %v506, %v513
    %v516 = vshrl.u32 %v498, %v514
    %v517 = vor.u32 %v515, %v516
    %v518 = vsub.s32 4294967266, %v513
    %v519 = vadd.s32 %v518, 127
    %v520 = vshll.u32 %v519, 23
    %v521 = vor.u32 4788187, %v520
    %v522 = vand.u32 2147483647, %v521
    %v524 = vcvt.s32.f32 %v517
    %v525 = vmul.f32 %v524, %v522
    %v526 = vxor.u32 %v525, 2147483648
    %v527 = vsel %vm406, %v526, %v525
    %v528 = vsub.s32 4, %v504
    %v529 = vsel %vm406, %v528, %v504
    %v530 = vsel %vm405, %v403, %v527
    %v531 = vsel %vm405, 0, %v529
    %v532 = vmul.f32 %v530, %v530
    %v533 = vmul.f32 %v532, -0.001358992
    %v534 = vadd.f32 %v533, 0.041655596
    %v535 = vmul.f32 %v532, %v534
    %v536 = vadd.f32 %v535, -0.4999988
    %v537 = vmul.f32 %v532, %v536
    %v538 = vadd.f32 1.0, %v537
    %v539 = vmul.f32 %v530, %v530
    %v540 = vmul.f32 %v539, -0.00019511016
    %v541 = vadd.f32 %v540, 0.008332121
    %v542 = vmul.f32 %v539, %v541
    %v543 = vadd.f32 %v542, -0.16666654
    %v544 = vmul.f32 %v539, %v543
    %v545 = vadd.f32 %v544, 1.0
    %v546 = vmul.f32 %v545, %v530
    %vm547 = vweird.f32 %v403
    %v548 = vand.u32 %v531, 3
    %vm549 = vcmp.lt.s32.totalorder %v548, 2
    %vm550 = vcmp.eq.s32.totalorder %v548, 0
    %v551 = vxor.u32 %v546, 2147483648
    %v552 = vsel %vm550, %v538, %v551
    %vm553 = vcmp.eq.s32.totalorder %v548, 2
    %v554 = vxor.u32 %v538, 2147483648
    %v555 = vsel %vm553, %v554, %v546
    %v556 = vsel %vm549, %v552, %v555
    %v557 = vsel %vm547, nan, %v556
    %v558 = vand.u32 2147483647, %v403
    %vm559 = vcmp.le.f32.partialorder %v558, 0.7853982
    %vm560 = vcmp.lt.s32.totalorder %v403, 0
    %v561 = vand.u32 %v403, 2139095040
    %v562 = vshrl.u32 %v561, 23
    %v563 = vsub.s32 %v562, 127
    %v564 = vand.u32 2147483647, %v403
    %v565 = vand.u32 %v564, 8388607
    %v566 = vor.u32 %v565, 8388608
    %v567 = vsub.s32 0, %v566
    %v568 = vadd.s32 %v563, 1
    %vm569 = vcmp.gt.s32.totalorder %v568, 0
    %v570 = vsel %vm569, %v568, 0
    %v571 = vshrl.u32 %v570, 5
    %v572 = vand.u32 %v570, 31
    %v573 = vsub.s32 32, %v572
    %v574 = vshrl.u32 683565275, %v573
    %v575 = vshll.u32 683565275, %v572
    %v576 = vshrl.u32 2475754826, %v573
    %v577 = vor.u32 %v575, %v576
    %v578 = vshll.u32 2475754826, %v572
    %v579 = vshrl.u32 2131351028, %v573
    %v580 = vor.u32 %v578, %v579
    %v581 = vshll.u32 2131351028, %v572
    %v582 = vshrl.u32 2102212464, %v573
    %v583 = vor.u32 %v581, %v582
    %v584 = vshll.u32 2102212464, %v572
    %v585 = vshrl.u32 920167782, %v573
    %v586 = vor.u32 %v584, %v585
    %v587 = vshll.u32 920167782, %v572
    %v588 = vshrl.u32 1326507024, %v573
    %v589 = vor.u32 %v587, %v588
    %vm590 = vcmp.lt.s32.totalorder %v571, 1
    %vm591 = vcmp.lt.s32.totalorder %v571, 2
    %vm592 = vcmp.lt.s32.totalorder %v571, 3
    %vm593 = vcmp.lt.s32.totalorder %v571, 4
    %v594 = vsel %vm590, %v574, %v577
    %v595 = vsel %vm593, %v583, 2102212464
    %v596 = vsel %vm592, %v580, %v595
    %v597 = vsel %vm591, %v594, %v596
    %v598 = vsel %vm590, %v577, %v580
    %v599 = vsel %vm593, %v586, 920167782
    %v600 = vsel %vm592, %v583, %v599
    %v601 = vsel %vm591, %v598, %v600
    %v602 = vsel %vm590, %v580, %v583
    %v603 = vsel %vm593, %v589, 1326507024
    %v604 = vsel %vm592, %v586, %v603
    %v605 = vsel %vm591, %v602, %v604
    %v606 = vshll.u32 %v566, 8
    %v607 = vand.u32 %v606, 65535
    %v608 = vshrl.u32 %v606, 16
    %v609 = vand.u32 %v605, 65535
    %v610 = vshrl.u32 %v605, 16
    %v611 = vmul.u32 %v607, %v609
    %v612 = vmul.u32 %v607, %v610
    %v613 = vmul.u32 %v608, %v609
    %v614 = vmul.u32 %v608, %v610
    %v615 = vshll.u32 %v612, 16
    %v616 = vshrl.u32 %v612, 16
    %v617 = vshll.u32 %v613, 16
    %v618 = vshrl.u32 %v613, 16
    %vm619 = vc.u32 %v611, %v615
    %v620 = vsel %vm619, 1, 0
    %v621 = vadd.s32 %v611, %v615
    %v622 = vadd.s32 %v614, %v620
    %vm623 = vc.u32 %v621, %v617
    %v624 = vsel %vm623, 1, 0
    %v625 = vadd.s32 %v621, %v617
    %v626 = vadd.s32 %v622, %v624
    %v627 = vadd.s32 %v626, %v616
    %v628 = vadd.s32 %v627, %v618
    %v629 = vand.u32 %v606, 65535
    %v630 = vshrl.u32 %v606, 16
    %v631 = vand.u32 %v601, 65535
    %v632 = vshrl.u32 %v601, 16
    %v633 = vmul.u32 %v629, %v631
    %v634 = vmul.u32 %v629, %v632
    %v635 = vmul.u32 %v630, %v631
    %v636 = vmul.u32 %v630, %v632
    %v637 = vshll.u32 %v634, 16
    %v638 = vshrl.u32 %v634, 16
    %v639 = vshll.u32 %v635, 16
    %v640 = vshrl.u32 %v635, 16
    %vm641 = vc.u32 %v633, %v637
    %v642 = vsel %vm641, 1, 0
    %v643 = vadd.s32 %v633, %v637
    %v644 = vadd.s32 %v636, %v642
    %vm645 = vc.u32 %v643, %v639
    %v646 = vsel %vm645, 1, 0
    %v647 = vadd.s32 %v643, %v639
    %v648 = vadd.s32 %v644, %v646
    %v649 = vadd.s32 %v648, %v638
    %v650 = vadd.s32 %v649, %v640
    %v651 = vmul.u32 %v606, %v597
    %v652 = vadd.s32 %v628, %v647
    %vm653 = vc.u32 %v628, %v647
    %v654 = vadd.s32 %v650, 1
    %v655 = vsel %vm653, %v654, %v650
    %v656 = vadd.s32 %v651, %v655
    %v657 = vadd.s32 %v656, 536870912
    %v658 = vshrl.u32 %v657, 30
    %v659 = vshll.u32 %v658, 30
    %v660 = vsub.s32 %v656, %v659
    %vm661 = vcmp.lt.s32.totalorder %v660, 0
    %v662 = vsub.s32 0, %v660
    %v663 = vsel %vm661, %v662, %v660
    %v664 = vclz %v663
    %v665 = vsub.s32 %v664, 2
    %vm666 = vcmp.gt.s32.totalorder 0, %v665
    %v667 = vsel %vm666, 0, %v665
    %v668 = vsub.s32 32, %v667
    %v669 = vshll.u32 %v660, %v667
    %v670 = vshrl.u32 %v652, %v668
    %v671 = vor.u32 %v669, %v670
    %v672 = vsub.s32 4294967266, %v667
    %v673 = vadd.s32 %v672, 127
    %v674 = vshll.u32 %v673, 23
    %v675 = vor.u32 4788187, %v674
    %v676 = vand.u32 2147483647, %v675
    %v678 = vcvt.s32.f32 %v671
    %v679 = vmul.f32 %v678, %v676
    %v680 = vxor.u32 %v679, 2147483648
    %v681 = vsel %vm560, %v680, %v679
    %v682 = vsub.s32 4, %v658
    %v683 = vsel %vm560, %v682, %v658
    %v684 = vsel %vm559, %v403, %v681
    %v685 = vsel %vm559, 0, %v683
    %v686 = vmul.f32 %v684, %v684
    %v687 = vmul.f32 %v686, -0.001358992
    %v688 = vadd.f32 %v687, 0.041655596
    %v689 = vmul.f32 %v686, %v688
    %v690 = vadd.f32 %v689, -0.4999988
    %v691 = vmul.f32 %v686, %v690
    %v692 = vadd.f32 1.0, %v691
    %v693 = vmul.f32 %v684, %v684
    %v694 = vmul.f32 %v693, -0.00019511016
    %v695 = vadd.f32 %v694, 0.008332121
    %v696 = vmul.f32 %v693, %v695
    %v697 = vadd.f32 %v696, -0.16666654
    %v698 = vmul.f32 %v693, %v697
    %v699 = vadd.f32 %v698, 1.0
    %v700 = vmul.f32 %v699, %v684
    %vm701 = vweird.f32 %v403
    %v702 = vadd.s32 %v685, 3
    %v703 = vand.u32 %v702, 3
    %vm704 = vcmp.lt.s32.totalorder %v703, 2
    %vm705 = vcmp.eq.s32.totalorder %v703, 0
    %v706 = vxor.u32 %v700, 2147483648
    %v707 = vsel %vm705, %v692, %v706
    %vm708 = vcmp.eq.s32.totalorder %v703, 2
    %v709 = vxor.u32 %v692, 2147483648
    %v710 = vsel %vm708, %v709, %v700
    %v711 = vsel %vm704, %v707, %v710
    %v712 = vsel %vm701, nan, %v711
    %v713 = vmul.f32 %v402, %v557
    %v714 = vadd.f32 %v400, %v713
    %v715 = vmul.f32 %v402, %v712
    %v716 = vsub.f32 %v400, %v713
    %v717 = vmul.f32 %v379, %v381
    %v718 = vmul.f32 %v380, %v380
    %v719 = vsub.f32 %v717, %v718
    %v720 = vmul.f32 %v714, %v716
    %v721 = vmul.f32 %v715, %v715
    %v722 = vsub.f32 %v720, %v721
    %v723 = vsub.f32 %v47, %v382
    %v724 = vsub.f32 %v49, %v384
    %v725 = vrcp.pop %v719
    %v726 = vmul.f32 %v719, %v725
    %v727 = vsub.f32 1.0, %v726
    %v728 = vmul.f32 %v725, %v727
    %v729 = vadd.f32 %v725, %v728
    %vm730 = vweird.f32 %v719
    %vm731 = vweird.f32 %v725
    %vm732 = vmor %vm730, %vm731
    %v733 = vsel %vm732, %v725, %v729
    %v734 = vand.u32 2147483647, %v719
    %vm735 = vcmp.eq.f32.partialorder %v734, 8.507059e+37
    %v736 = vand.u32 %v719, 2147483648
    %v737 = vor.u32 1.1754944e-38, %v736
    %v738 = vsel %vm735, %v737, %v733
    %v739 = vmul.f32 1.0, %v738
    %v740 = vmul.f32 %v381, %v723
    %v741 = vmul.f32 %v740, %v723
    %v742 = vmul.f32 %v380, 2.0
    %v743 = vmul.f32 %v742, %v723
    %v744 = vmul.f32 %v743, %v724
    %v745 = vsub.f32 %v741, %v744
    %v746 = vmul.f32 %v379, %v724
    %v747 = vmul.f32 %v746, %v724
    %v748 = vadd.f32 %v745, %v747
    %v749 = vmul.f32 %v748, 0.5
    %v750 = vmul.f32 %v749, %v739
    %v751 = vmul.f32 %v381, %v714
    %v752 = vmul.f32 %v742, %v715
    %v753 = vsub.f32 %v751, %v752
    %v754 = vmul.f32 %v379, %v716
    %v755 = vadd.f32 %v753, %v754
    %v756 = vmul.f32 %v755, %v739
    %v757 = vmul.f32 %v756, 0.5
    %v758 = vmax.f32 %v719, 1e-07
    %v759 = vmax.f32 %v722, 1e-07
    %v760 = vrcp.pop %v759
    %v761 = vmul.f32 %v759, %v760
    %v762 = vsub.f32 1.0, %v761
    %v763 = vmul.f32 %v760, %v762
    %v764 = vadd.f32 %v760, %v763
    %vm765 = vweird.f32 %v759
    %vm766 = vweird.f32 %v760
    %vm767 = vmor %vm765, %vm766
    %v768 = vsel %vm767, %v760, %v764
    %v769 = vand.u32 2147483647, %v759
    %vm770 = vcmp.eq.f32.partialorder %v769, 8.507059e+37
    %v771 = vand.u32 %v759, 2147483648
    %v772 = vor.u32 1.1754944e-38, %v771
    %v773 = vsel %vm770, %v772, %v768
    %v774 = vmul.f32 %v758, %v773
    %v775 = vlog2.pop %v774
    %v776 = vmul.f32 %v775, 0.6931472
    %v777 = vmul.f32 %v776, 0.5
    %v778 = vadd.f32 %v757, %v777
    %v779 = vsub.f32 %v778, 1.0
    %v780 = vadd.f32 %v750, %v779
    %v781 = vmax.f32 %v780, 1e-07
    %v782 = vrsqrt.pop %v781
    %v783 = vmul.f32 %v782, %v781
    %v784 = vmul.f32 %v783, %v782
    %v785 = vmul.f32 0.5, %v784
    %v786 = vsub.f32 1.5, %v785
    %v787 = vmul.f32 %v782, %v786
    %v788 = vmul.f32 %v781, %v787
    %vm789 = vcmp.eq.f32.partialorder %v781, inf
    %v790 = vsel %vm789, %v781, %v788
    %vm791 = vcmp.eq.f32.partialorder %v781, 0.0
    %v792 = vand.u32 %v781, 2147483648
    %v793 = vsel %vm791, %v792, %v790
    %794 = vst [vmem:[#allocation8] sm:$0x1] %v793
    %v795 = vadd.f32 %v793, 2.0
    %v796 = vrcp.pop %v795
    %v797 = vmul.f32 %v795, %v796
    %v798 = vsub.f32 1.0, %v797
    %v799 = vmul.f32 %v796, %v798
    %v800 = vadd.f32 %v796, %v799
    %vm801 = vweird.f32 %v795
    %vm802 = vweird.f32 %v796
    %vm803 = vmor %vm801, %vm802
    %v804 = vsel %vm803, %v796, %v800
    %v805 = vand.u32 2147483647, %v795
    %vm806 = vcmp.eq.f32.partialorder %v805, 8.507059e+37
    %v807 = vand.u32 %v795, 2147483648
    %v808 = vor.u32 1.1754944e-38, %v807
    %v809 = vsel %vm806, %v808, %v804
    %v810 = vmul.f32 1.0, %v809
    %v811 = vsub.f32 1.0, %v810
    %812 = vst [vmem:[#allocation7] sm:$0x1] %v811
    // Predicated region
    $region18: #{tpu_custom_call.1} parent=1 // pred_check
      _
    $region19: #{tpu_custom_call.1} parent=1 // pred_check_branch
      %814 = sbr.rel (0) target = $region21
    $region20: #{tpu_custom_call.1} parent=1 // pred_region
      %816 = vsyncadd [#allocation4], 0
      %s818 = sshll.u32 [#allocation7], 4
      %s819 = int_to_ptr.vmem [resolvable:$true] %s818
      %s820 = sshll.u32 %s2, 4
      %s821 = int_to_ptr.hbm [resolvable:$true] %s820
      %823 = dma.vmem_to_hbm [thread:$0]  %s819, 16, %s821, [#allocation4]
    $region21: #{tpu_custom_call.1} parent=1 // pred_fallthru
      _
    // Predicated region
    $region22: #{tpu_custom_call.1} parent=1 // pred_check
      _
    $region23: #{tpu_custom_call.1} parent=1 // pred_check_branch
      %825 = sbr.rel (0) target = $region25
    $region24: #{tpu_custom_call.1} parent=1 // pred_region
      %827 = vsyncadd [#allocation9], 0
      %s829 = sshll.u32 [#allocation8], 4
      %s830 = int_to_ptr.vmem [resolvable:$true] %s829
      %s831 = sshll.u32 %s3, 4
      %s832 = int_to_ptr.hbm [resolvable:$true] %s831
      %834 = dma.vmem_to_hbm [thread:$0]  %s830, 16, %s832, [#allocation9]
    $region25: #{tpu_custom_call.1} parent=1 // pred_fallthru
      _
    // Predicated region
    $region26: #{tpu_custom_call.1} parent=1 // pred_check
      _
    $region27: #{tpu_custom_call.1} parent=1 // pred_check_branch
      %836 = sbr.rel (0) target = $region29
    $region28: #{tpu_custom_call.1} parent=1 // pred_region
      %838 = dma.done [#allocation4], 16
    $region29: #{tpu_custom_call.1} parent=1 // pred_fallthru
      _
    // Predicated region
    $region30: #{tpu_custom_call.1} parent=1 // pred_check
      _
    $region31: #{tpu_custom_call.1} parent=1 // pred_check_branch
      %840 = sbr.rel (0) target = $region33
    $region32: #{tpu_custom_call.1} parent=1 // pred_region
      %842 = dma.done [#allocation9], 16
    $region33: #{tpu_custom_call.1} parent=1 // pred_fallthru
      _
    %843 = vsyncpa [#allocation3], 1
    %844 = vsyncpa [#allocation6], 1
    %845 = vsyncpa [#allocation4], 1
    %846 = vsyncpa [#allocation9], 1

</llo_original>
